<compile_context>
chip_gen: v7x
topology: tpu7x:2x2x1
jax: 0.10.0
libtpu: 0.0.40
codegen_flags: <defaults>
</compile_context>

<pallas_src>
import math

import jax
import jax.numpy as jnp
from jax.experimental import pallas as pl
from jax.experimental.pallas import tpu as pltpu

_LANES = 128                 # TPU vreg lane width
_MAX_TILE_ROWS = 1024        # rows per grid step (multiple of 8 sublanes)
_TILE_BYTES_BUDGET = 2 << 20 # per-tile output bytes (Pallas double-buffers this)
_MAX_ROW_WIDTH = 16384       # safety cap for the lcm lane-packing


def _round_up(x: int, m: int) -> int:
    return (x + m - 1) // m * m


def _rope_cache_kernel(coef_ref, o_ref):
    """Writes one [tile_rows, row_width] tile of the packed rope cache.

    coef_ref is a (2, row_width) per-lane constant table:
      coef[0, lane] = pack * theta[(lane % width) // 2]
      coef[1, lane] = (lane // width) * theta[(lane % width) // 2] + phase[lane]
    with phase = -pi/2 on sin lanes (odd columns) and 0 on cos lanes, so
      out[row, lane] = cos(global_row * coef0[lane] + coef1[lane])
                     = cos(seq * theta)   on cos lanes
                     = sin(seq * theta)   on sin lanes
    where seq = global_row * pack + lane // width.
    """
    tile_rows, row_width = o_ref.shape
    row0 = pl.program_id(0) * tile_rows
    row = jax.lax.broadcasted_iota(jnp.int32, (tile_rows, row_width), 0) + row0
    a = coef_ref[0:1, :]   # (1, row_width): per-lane slope  (pack * theta)
    b = coef_ref[1:2, :]   # (1, row_width): per-lane offset (seq_off*theta + phase)
    # Single transcendental per element; EUP slot is the only heavy user.
    o_ref[...] = jnp.cos(row.astype(jnp.float32) * a + b)


def rope_cache(seq_len: int, n_elem: int, base: int = 10000):
    """Returns the [seq_len, n_elem//2, 2] float32 rope cache (cos, sin)."""
    d2 = n_elem // 2
    width = 2 * d2  # interleaved (cos, sin) per sequence position

    # Lane-dense packing: smallest row width that is a multiple of both `width`
    # (so unpacking is a pure contiguous reshape) and 128 lanes (so every store
    # is an unmasked full-width vst).
    row_width = math.lcm(width, _LANES)
    if row_width > _MAX_ROW_WIDTH:
        # Unrealistically large head dim: fall back to masked partial stores.
        row_width = width
    pack = row_width // width

    # Per-lane coefficient table (computed once in plain JAX; theta is the
    # exact reference expression, no exp() approximation).
    theta = 1.0 / (base ** (jnp.arange(0, n_elem, 2, dtype=jnp.float32) / n_elem))
    lane = jnp.arange(row_width, dtype=jnp.int32)
    col = lane % width
    theta_lane = theta[col // 2]                                   # [row_width]
    phase_lane = jnp.where(col % 2 == 1, -math.pi / 2, 0.0).astype(jnp.float32)
    seq_off = (lane // width).astype(jnp.float32)
    coef = jnp.stack(
        [pack * theta_lane, seq_off * theta_lane + phase_lane], axis=0
    ).astype(jnp.float32)                                          # (2, row_width)

    rows = pl.cdiv(seq_len, pack)

    # Tile rows: multiple of 8 sublanes, VMEM-bounded, and >= 2 grid steps
    # whenever rows > 8 so both v7x TensorCores get work on the parallel axis.
    vmem_rows = max(8, (_TILE_BYTES_BUDGET // (4 * row_width)) // 8 * 8)
    cap = min(_MAX_TILE_ROWS, vmem_rows)
    if rows <= cap:
        tile_rows = min(cap, max(8, _round_up(pl.cdiv(rows, 2), 8)))
    else:
        tile_rows = cap
    num_tiles = pl.cdiv(rows, tile_rows)
    rows_padded = num_tiles * tile_rows  # kernel fills the pad rows; sliced below

    n_out = rows_padded * row_width
    out = pl.pallas_call(
        _rope_cache_kernel,
        out_shape=jax.ShapeDtypeStruct((rows_padded, row_width), jnp.float32),
        grid=(num_tiles,),
        in_specs=[pl.BlockSpec((2, row_width), lambda i: (0, 0))],
        out_specs=pl.BlockSpec((tile_rows, row_width), lambda i: (i, 0)),
        compiler_params=pltpu.CompilerParams(
            dimension_semantics=("parallel",),
        ),
        cost_estimate=pl.CostEstimate(
            flops=4 * n_out,              # iota add + convert + mul + add
            transcendentals=n_out,        # one cos per output element
            bytes_accessed=4 * n_out + 4 * coef.size,
        ),
    )(coef)

    # Pure contiguous (row-major) reshape back to the module's cache layout;
    # padded trailing rows (seq positions >= seq_len) are sliced off here.
    cache = out.reshape(rows_padded * pack, d2, 2)
    if rows_padded * pack != seq_len:
        cache = cache[:seq_len]
    return cache


class RotaryEmbedding:
    """JAX/Pallas port of chatglm2 RotaryEmbedding (forward pass only)."""

    def __init__(self, dim, original_impl=False):
        self.dim = dim
        self.original_impl = original_impl
        # register_buffer('inv_freq', ...) equivalent (float32, deterministic).
        self.inv_freq = 1.0 / (
            10000.0 ** (jnp.arange(0, dim, 2, dtype=jnp.float32) / dim)
        )

    def __call__(self, max_seq_len, offset=0, base=10000):
        # forward() -> forward_impl(max_seq_len, dim, dtype=float32);
        # `offset` is unused in the original forward as well.
        return rope_cache(max_seq_len, self.dim, base=base)


def _reference(max_seq_len, dim, base=10000):
    theta = 1.0 / (base ** (jnp.arange(0, dim, 2, dtype=jnp.float32) / dim))
    seq_idx = jnp.arange(max_seq_len, dtype=jnp.float32)
    idx_theta = jnp.outer(seq_idx, theta).astype(jnp.float32)
    return jnp.stack([jnp.cos(idx_theta), jnp.sin(idx_theta)], axis=-1)


if __name__ == "__main__":
    _ = jax.random.PRNGKey(0)  # no random inputs; kept for convention

    # Primary small shape: dim=32 -> d2=16, 2 seq positions packed per row.
    dim = 32
    max_seq_len = 8

    rope = RotaryEmbedding(dim, original_impl=True)
    cache = jax.block_until_ready(rope(max_seq_len))

    ref = _reference(max_seq_len, dim)
    assert cache.shape == (max_seq_len, dim // 2, 2), cache.shape
    assert cache.dtype == jnp.float32, cache.dtype
    assert jnp.allclose(cache, ref, atol=1e-5, rtol=1e-5), "mismatch vs reference"

    # Extra coverage: multi-tile grid + padded last block + tail slice.
    # (Looser atol: at large seq*theta, f32 phase error grows ~ arg * eps,
    #  inherent to any f32 RoPE cache, independent of this kernel.)
    cache2 = jax.block_until_ready(rope_cache(2050, dim))
    ref2 = _reference(2050, dim)
    assert cache2.shape == (2050, dim // 2, 2), cache2.shape
    assert jnp.allclose(cache2, ref2, atol=2e-3, rtol=1e-5), "mismatch (tiled)"

    # Extra coverage: width == 128 path (pack=1), typical d2 = 64.
    cache3 = jax.block_until_ready(rope_cache(8, 128))
    ref3 = _reference(8, 128)
    assert jnp.allclose(cache3, ref3, atol=1e-5, rtol=1e-5), "mismatch (d2=64)"

    # Extra coverage: width (=96) not dividing 128 -> lcm lane packing (384).
    cache4 = jax.block_until_ready(rope_cache(16, 96))
    ref4 = _reference(16, 96)
    assert cache4.shape == (16, 48, 2), cache4.shape
    assert jnp.allclose(cache4, ref4, atol=1e-4, rtol=1e-5), "mismatch (d2=48)"

    print("KERNEL_OK")
</pallas_src>

<mosaic_0001>
module attributes {stable_mosaic.version = 11 : i64} {
  func.func @_rope_cache_kernel(%arg0: i32, %arg1: memref<2x128xf32, #tpu.memory_space<vmem>>, %arg2: memref<8x128xf32, #tpu.memory_space<vmem>>) attributes {dimension_semantics = [#tpu.dimension_semantics<parallel>], iteration_bounds = array<i64: 1>, scalar_prefetch = 0 : i64, scratch_operands = 0 : i64, tpu.core_type = #tpu.core_type<tc>, window_params = [{pipeline_mode = #tpu.pipeline_mode<synchronous>, transform_indices = @transform_0, window_bounds = array<i64: 2, 128>}, {transform_indices = @transform_1, window_bounds = array<i64: 8, 128>}]} {
    %c8_i32 = arith.constant 8 : i32
    %0 = arith.muli %arg0, %c8_i32 : i32
    %1 = tpu.iota {dimensions = array<i32: 0>} : vector<8x128xi32>
    %2 = vector.broadcast %0 : i32 to vector<8x128xi32>
    %3 = arith.addi %1, %2 : vector<8x128xi32>
    %c0 = arith.constant 0 : index
    %c0_0 = arith.constant 0 : index
    %4 = vector.load %arg1[%c0, %c0_0] : memref<2x128xf32, #tpu.memory_space<vmem>>, vector<1x128xf32>
    %c1 = arith.constant 1 : index
    %c0_1 = arith.constant 0 : index
    %5 = vector.load %arg1[%c1, %c0_1] : memref<2x128xf32, #tpu.memory_space<vmem>>, vector<1x128xf32>
    %6 = arith.sitofp %3 : vector<8x128xi32> to vector<8x128xf32>
    %7 = vector.broadcast %4 : vector<1x128xf32> to vector<8x128xf32>
    %8 = arith.mulf %6, %7 : vector<8x128xf32>
    %9 = vector.broadcast %5 : vector<1x128xf32> to vector<8x128xf32>
    %10 = arith.addf %8, %9 : vector<8x128xf32>
    %11 = math.cos %10 : vector<8x128xf32>
    %c0_2 = arith.constant 0 : index
    %c0_3 = arith.constant 0 : index
    %12 = vector.load %arg2[%c0_2, %c0_3] : memref<8x128xf32, #tpu.memory_space<vmem>>, vector<8x128xf32>
    tpu.vector_store %arg2[%c0_2, %c0_3], %11 {strides = array<i32>} : memref<8x128xf32, #tpu.memory_space<vmem>>, vector<8x128xf32>,
    return
  }
  func.func @transform_0(%arg0: i32) -> (i32, i32) {
    %c0_i32 = arith.constant 0 : i32
    %c0_i32_0 = arith.constant 0 : i32
    %c0_i32_1 = arith.constant 0 : i32
    return %c0_i32, %c0_i32_0 : i32, i32
  }
  func.func @transform_1(%arg0: i32) -> (i32, i32) {
    %c0_i32 = arith.constant 0 : i32
    %c0_i32_0 = arith.constant 0 : i32
    return %arg0, %c0_i32 : i32, i32
  }
}

</mosaic_0001>

<llo_original>
// kernel: tpu_custom_call.1
$region0: #{tpu_custom_call.1}
  #allocation0 [shape = 'u32[]', space=smem, size = 0x4, offset = 0x4, fixed_abs, tag = 'smem constant byte address 0x4 - core index']
  #allocation1 [shape = 'u32[144,128]{1,0:T(1,128)}', space=vmem, size = 0x12000, scoped, tag = 'internal scratch']
  %s0 = inlined_call_operand.hbm [shape: f32[2,128], index: 0, kind: input, shape index: {}]
  %s1 = inlined_call_operand.hbm [shape: f32[8,128], index: 1, kind: output, shape index: {}]
  %s2 = sld [smem:[#allocation0]]
  $region18: #{tpu_custom_call.1} parent=0
    _
  %s4 = ssub.s32 1, %s2
  %s5 = scalar_select 0, %s4, %s2
  $region1: #{tpu_custom_call.1} parent=0
    #allocation2 [shape = 'u8[1024]{0}', space=vmem, size = 0x400, scoped, tag = 'input window, operand 0, single buffered']
    #allocation3 [shape = 's32[1]{0}', space=sflag, size = 0x4, scoped, tag = 'scoped memory for tpu_custom_call.1']
    #allocation4 [shape = 's32[1]{0}', space=sflag, size = 0x4, scoped, tag = 'scoped memory for tpu_custom_call.1']
    #allocation5 [shape = 'u8[4096]{0}', space=vmem, size = 0x1000, scoped, tag = 'output window, operand 0, single buffered']
    %6 = vsyncpa [#allocation3], 0
    %7 = vsyncpa [#allocation4], 0
    // Predicated region
    $region2: #{tpu_custom_call.1} parent=1 // pred_check
      _
    $region3: #{tpu_custom_call.1} parent=1 // pred_check_branch
      %9 = sbr.rel (0) target = $region5
    $region4: #{tpu_custom_call.1} parent=1 // pred_region
      %s11 = ssub.s32 32, 32
      %12 = vsyncadd [#allocation3], %s11
      %s14 = sshll.u32 [#allocation2], 4
      %s15 = int_to_ptr.vmem [resolvable:$true] %s14
      %17 = dma.hbm_to_vmem [thread:$0]  %s0, 32, %s15, [#allocation3]
    $region5: #{tpu_custom_call.1} parent=1 // pred_fallthru
      _
    // Predicated region
    $region6: #{tpu_custom_call.1} parent=1 // pred_check
      _
    $region7: #{tpu_custom_call.1} parent=1 // pred_check_branch
      %19 = sbr.rel (0) target = $region9
    $region8: #{tpu_custom_call.1} parent=1 // pred_region
      %20 = dma.done [#allocation3], 32
    $region9: #{tpu_custom_call.1} parent=1 // pred_fallthru
      _
    %s21 = smul.u32 0, 8
    %v22 = vlaneseq
    %v23 = vshrl.u32 %v22, 7
    %v24 = vstv %s21
    %v25 = vadd.s32 %v23, %v24
    %v26 = vld [vmem:[#allocation2] sm:$0x1]
    %v27 = vld [vmem:[#allocation2 + $0x1] sm:$0x1]
    %v28 = vcvt.s32.f32 %v25
    %v29 = vlaneseq
    %v30 = vshrl.u32 %v29, 7
    %v31 = vsub.s32 0, %v30
    %v32 = vrot.slane %v26, %v31
    %v33 = vmul.f32 %v28, %v32
    %v34 = vlaneseq
    %v35 = vshrl.u32 %v34, 7
    %v36 = vsub.s32 0, %v35
    %v37 = vrot.slane %v27, %v36
    %v38 = vadd.f32 %v33, %v37
    %v39 = vand.u32 2147483647, %v38
    %vm40 = vcmp.le.f32.partialorder %v39, 0.7853982
    %vm41 = vcmp.lt.s32.totalorder %v38, 0
    %v42 = vand.u32 %v38, 2139095040
    %v43 = vshrl.u32 %v42, 23
    %v44 = vsub.s32 %v43, 127
    %v45 = vand.u32 2147483647, %v38
    %v46 = vand.u32 %v45, 8388607
    %v47 = vor.u32 %v46, 8388608
    %v48 = vsub.s32 0, %v47
    %v49 = vadd.s32 %v44, 1
    %vm50 = vcmp.gt.s32.totalorder %v49, 0
    %v51 = vsel %vm50, %v49, 0
    %v52 = vshrl.u32 %v51, 5
    %v53 = vand.u32 %v51, 31
    %v54 = vsub.s32 32, %v53
    %v55 = vshrl.u32 683565275, %v54
    %v56 = vshll.u32 683565275, %v53
    %v57 = vshrl.u32 2475754826, %v54
    %v58 = vor.u32 %v56, %v57
    %v59 = vshll.u32 2475754826, %v53
    %v60 = vshrl.u32 2131351028, %v54
    %v61 = vor.u32 %v59, %v60
    %v62 = vshll.u32 2131351028, %v53
    %v63 = vshrl.u32 2102212464, %v54
    %v64 = vor.u32 %v62, %v63
    %v65 = vshll.u32 2102212464, %v53
    %v66 = vshrl.u32 920167782, %v54
    %v67 = vor.u32 %v65, %v66
    %v68 = vshll.u32 920167782, %v53
    %v69 = vshrl.u32 1326507024, %v54
    %v70 = vor.u32 %v68, %v69
    %vm71 = vcmp.lt.s32.totalorder %v52, 1
    %vm72 = vcmp.lt.s32.totalorder %v52, 2
    %vm73 = vcmp.lt.s32.totalorder %v52, 3
    %vm74 = vcmp.lt.s32.totalorder %v52, 4
    %v75 = vsel %vm71, %v55, %v58
    %v76 = vsel %vm74, %v64, 2102212464
    %v77 = vsel %vm73, %v61, %v76
    %v78 = vsel %vm72, %v75, %v77
    %v79 = vsel %vm71, %v58, %v61
    %v80 = vsel %vm74, %v67, 920167782
    %v81 = vsel %vm73, %v64, %v80
    %v82 = vsel %vm72, %v79, %v81
    %v83 = vsel %vm71, %v61, %v64
    %v84 = vsel %vm74, %v70, 1326507024
    %v85 = vsel %vm73, %v67, %v84
    %v86 = vsel %vm72, %v83, %v85
    %v87 = vshll.u32 %v47, 8
    %v88 = vmul.u32.u64.compose %v87, %v86
    %v89 = vextract.low.u32 %v88
    %v90 = vextract.high.u32 %v88
    %v91 = vmul.u32.u64.compose %v87, %v82
    %v92 = vextract.low.u32 %v91
    %v93 = vextract.high.u32 %v91
    %v94 = vmul.u32 %v87, %v78
    %v95 = vadd.s32 %v90, %v92
    %vm96 = vc.u32 %v90, %v92
    %v97 = vadd.s32 %v93, 1
    %v98 = vsel %vm96, %v97, %v93
    %v99 = vadd.s32 %v94, %v98
    %v100 = vadd.s32 %v99, 536870912
    %v101 = vshrl.u32 %v100, 30
    %v102 = vshll.u32 %v101, 30
    %v103 = vsub.s32 %v99, %v102
    %vm104 = vcmp.lt.s32.totalorder %v103, 0
    %v105 = vsub.s32 0, %v103
    %v106 = vsel %vm104, %v105, %v103
    %v107 = vclz %v106
    %v108 = vsub.s32 %v107, 2
    %vm109 = vcmp.gt.s32.totalorder 0, %v108
    %v110 = vsel %vm109, 0, %v108
    %v111 = vsub.s32 32, %v110
    %v112 = vshll.u32 %v103, %v110
    %v113 = vshrl.u32 %v95, %v111
    %v114 = vor.u32 %v112, %v113
    %v115 = vsub.s32 4294967266, %v110
    %v116 = vadd.s32 %v115, 127
    %v117 = vshll.u32 %v116, 23
    %v118 = vor.u32 4788187, %v117
    %v119 = vand.u32 2147483647, %v118
    %v121 = vcvt.s32.f32 %v114
    %v122 = vmul.f32 %v121, %v119
    %v123 = vxor.u32 %v122, 2147483648
    %v124 = vsel %vm41, %v123, %v122
    %v125 = vsub.s32 4, %v101
    %v126 = vsel %vm41, %v125, %v101
    %v127 = vsel %vm40, %v38, %v124
    %v128 = vsel %vm40, 0, %v126
    %v129 = vcosq.f32.pop %v127
    %v130 = vsinq.f32.pop %v127
    %vm131 = vweird.f32 %v38
    %v132 = vand.u32 %v128, 3
    %vm133 = vcmp.lt.s32.totalorder %v132, 2
    %vm134 = vcmp.eq.s32.totalorder %v132, 0
    %v135 = vxor.u32 %v130, 2147483648
    %v136 = vsel %vm134, %v129, %v135
    %vm137 = vcmp.eq.s32.totalorder %v132, 2
    %v138 = vxor.u32 %v129, 2147483648
    %v139 = vsel %vm137, %v138, %v130
    %v140 = vsel %vm133, %v136, %v139
    %v141 = vsel %vm131, nan, %v140
    %142 = vst [vmem:[#allocation5] sm:$0xff] %v141
    // Predicated region
    $region10: #{tpu_custom_call.1} parent=1 // pred_check
      _
    $region11: #{tpu_custom_call.1} parent=1 // pred_check_branch
      %144 = sbr.rel (0) target = $region13
    $region12: #{tpu_custom_call.1} parent=1 // pred_region
      %s146 = ssub.s32 128, 128
      %147 = vsyncadd [#allocation4], %s146
      %s149 = sshll.u32 [#allocation5], 4
      %s150 = int_to_ptr.vmem [resolvable:$true] %s149
      %152 = dma.vmem_to_hbm [thread:$0]  %s150, 128, %s1, [#allocation4]
    $region13: #{tpu_custom_call.1} parent=1 // pred_fallthru
      _
    // Predicated region
    $region14: #{tpu_custom_call.1} parent=1 // pred_check
      _
    $region15: #{tpu_custom_call.1} parent=1 // pred_check_branch
      %154 = sbr.rel (0) target = $region17
    $region16: #{tpu_custom_call.1} parent=1 // pred_region
      %155 = dma.done [#allocation4], 128
    $region17: #{tpu_custom_call.1} parent=1 // pred_fallthru
      _
    %156 = vsyncpa [#allocation3], 1
    %157 = vsyncpa [#allocation4], 1

</llo_original>
